<compile_context>
chip_gen: v5e
topology: v5e:2x2
jax: 0.10.0
libtpu: 0.0.40
codegen_flags: <defaults>
</compile_context>

<pallas_src>
import numpy as np
import jax
import jax.numpy as jnp
from jax.experimental import pallas as pl
from jax.experimental.pallas import tpu as pltpu


# ----------------------------- Pallas kernel ------------------------------- #

def _make_aconv_kernel(wr: int, fuse_k: bool):
    """Build the fused AConv kernel.

    wr     : real (unpadded) output width; columns >= wr of the padded planes
             are the conv's zero border / discarded padding.
    fuse_k : True  -> one K=9*Cin MXU dot (shallow Cin),
             False -> 9 accumulated K=Cin dots (MXU-deep Cin).
    """

    def kernel(xp_ref, w_ref, b_ref, o_ref, pee_ref, peo_ref, poe_ref):
        # xp_ref : (4, Hout, Wp, Cin) bf16 parity planes of the input image:
        #          plane 2a+b holds X_ab[i, j, c] = x[2i+a, 2j+b, c].
        # w_ref  : bf16 conv weights with BN scale folded in
        #          (9*Cin, Coutp) if fuse_k else (9, Cin, Coutp).
        # b_ref  : (1, Coutp) f32 folded BN bias.
        # o_ref  : (1, Hout*Wp, Coutp) lane-dense output block.
        # pee/peo/poe_ref : f32 VMEM scratch = parity planes of the zero-padded
        #          pooled image (the odd/odd parity never touches the border
        #          and stays a plain value).
        xee = xp_ref[0].astype(jnp.float32)          # (Hout, Wp, Cin)
        xeo = xp_ref[1].astype(jnp.float32)
        xoe = xp_ref[2].astype(jnp.float32)
        xoo = xp_ref[3].astype(jnp.float32)
        hh, wp, cin = xee.shape
        coutp = o_ref.shape[-1]
        zf = jnp.float32

        # ---- AvgPool(2, s1, p0) + conv zero padding, parity-decomposed ---- #
        # pooled_pad[p, q] with p = 2i+a, q = 2j+b:
        #   (a,b)=(1,1): interior everywhere -> plain value
        #   others     : scratch planes; zero only the border rows/cols.
        p_oo = 0.25 * (xee + xeo + xoe + xoo)

        poe_ref[:, 0:1, :] = jnp.zeros((hh, 1, cin), zf)
        poe_ref[:, wr:, :] = jnp.zeros((hh, poe_ref.shape[1] - wr, cin), zf)
        poe_ref[:, 1:wr, :] = 0.25 * (xeo[:, :wr - 1] + xoo[:, :wr - 1]
                                      + xee[:, 1:wr] + xoe[:, 1:wr])

        peo_ref[0:1, :, :] = jnp.zeros((1, wp, cin), zf)
        peo_ref[hh:hh + 1, :, :] = jnp.zeros((1, wp, cin), zf)
        peo_ref[1:hh, :, :] = 0.25 * (xoe[:hh - 1] + xoo[:hh - 1]
                                      + xee[1:] + xeo[1:])

        pee_ref[0:1, :, :] = jnp.zeros((1, wp + 1, cin), zf)
        pee_ref[hh:hh + 1, :, :] = jnp.zeros((1, wp + 1, cin), zf)
        pee_ref[:, 0:1, :] = jnp.zeros((hh + 1, 1, cin), zf)
        pee_ref[:, wr:, :] = jnp.zeros((hh + 1, pee_ref.shape[1] - wr, cin), zf)
        pee_ref[1:hh, 1:wr, :] = 0.25 * (xoo[:hh - 1, :wr - 1] + xeo[1:, :wr - 1]
                                         + xoe[:hh - 1, 1:wr] + xee[1:, 1:wr])

        # ---- 3x3 / stride-2 conv: tap (kh,kw) is a dense slice of a plane -- #
        # TODO(synk): the +1 W-offset slices below are sublane-misaligned; a
        #             pltpu.roll-based shifted view could route them to the XLU.
        taps = (
            pee_ref[0:hh, 0:wp, :],          # (kh, kw) = (0, 0)
            peo_ref[0:hh, :, :],             # (0, 1)
            pee_ref[0:hh, 1:wp + 1, :],      # (0, 2)
            poe_ref[:, 0:wp, :],             # (1, 0)
            p_oo,                            # (1, 1)
            poe_ref[:, 1:wp + 1, :],         # (1, 2)
            pee_ref[1:hh + 1, 0:wp, :],      # (2, 0)
            peo_ref[1:hh + 1, :, :],         # (2, 1)
            pee_ref[1:hh + 1, 1:wp + 1, :],  # (2, 2)
        )
        pp = hh * wp                         # wp % 8 == 0 -> reshapes are free

        if fuse_k:
            # Shallow Cin: single MXU dot with contraction depth K = 9*Cin.
            a = jnp.concatenate(
                [t.reshape(pp, cin).astype(jnp.bfloat16) for t in taps], axis=-1)
            acc = jnp.dot(a, w_ref[...], preferred_element_type=jnp.float32)
        else:
            # MXU-deep Cin: 9 accumulated dots (K = Cin each).
            acc = jnp.zeros((pp, coutp), jnp.float32)
            for k, t in enumerate(taps):     # static unroll, 9 taps
                acc += jnp.dot(t.reshape(pp, cin).astype(jnp.bfloat16), w_ref[k],
                               preferred_element_type=jnp.float32)

        # ---- folded BN bias + SiLU (exp + approx reciprocal -> EUP slot) --- #
        y = acc + b_ref[...]
        sig = pl.reciprocal(1.0 + jnp.exp(-y), approx=True)
        o_ref[0] = (y * sig).astype(o_ref.dtype)

    return kernel


# ------------------------------- Wrapper ----------------------------------- #

def _round_up(v, m):
    return (v + m - 1) // m * m


def aconv_forward(x_nchw, weight, gamma, beta, run_mean, run_var, eps=1e-3):
    """AConv forward. x_nchw: (N, Cin, H, W); weight: (Cout, Cin, 3, 3)."""
    n, cin, hgt, wid = x_nchw.shape
    cout = weight.shape[0]
    # TODO(synk): odd H/W needs one extra boundary row/col of parity planes;
    #             only even spatial dims are handled here.
    assert hgt % 2 == 0 and wid % 2 == 0, "even spatial dims expected"
    hout, wr = hgt // 2, wid // 2
    assert hout >= 2 and wr >= 2
    wp = _round_up(wr, 8)                       # sublane-aligned width
    pp = hout * wp
    coutp = max(_round_up(cout, 128), 128)      # lane-dense output block
    fuse_k = cin < 128                          # single K=9*Cin dot for shallow layers

    # Parity-split, channels-last, bf16 planes (plane index = 2a + b).  The
    # transpose replaces the NCHW->NHWC pass we needed anyway; the bf16 cast
    # halves the HBM->VMEM DMA bytes for the dominant input.
    xp = x_nchw.reshape(n, cin, hout, 2, wr, 2)
    xp = jnp.transpose(xp, (0, 3, 5, 2, 4, 1)).astype(jnp.bfloat16)
    xp = xp.reshape(n * 4, hout, wr, cin)
    if wp != wr:
        xp = jnp.pad(xp, ((0, 0), (0, 0), (0, wp - wr), (0, 0)))

    # Fold eval-mode BatchNorm into the conv weights / bias; pad Cout; bf16.
    scale = gamma / jnp.sqrt(run_var + eps)                    # (Cout,)
    bias = beta - run_mean * scale                             # (Cout,)
    w = jnp.transpose(weight, (2, 3, 1, 0)) * scale[None, None, None, :]  # (3,3,Cin,Cout)
    # TODO(synk): single-buffer this constant block (pl.Buffered(1)) to save
    #             VMEM once buffer_count=1 is supported on the target jax.
    if fuse_k:
        w = jnp.pad(w.reshape(9 * cin, cout),
                    ((0, 0), (0, coutp - cout))).astype(jnp.bfloat16)
        w_spec = pl.BlockSpec((9 * cin, coutp), lambda b: (0, 0))
    else:
        w = jnp.pad(w.reshape(9, cin, cout),
                    ((0, 0), (0, 0), (0, coutp - cout))).astype(jnp.bfloat16)
        w_spec = pl.BlockSpec((9, cin, coutp), lambda b: (0, 0, 0))
    b2 = jnp.pad(bias.astype(jnp.float32), (0, coutp - cout)).reshape(1, coutp)

    # VMEM budget: double-buffered pipeline blocks + f32 scratch planes +
    # headroom for the im2col tile / accumulator, with 2x slack.
    blk_bytes = (2 * 4 * hout * wp * cin * 2            # xp block (bf16) x2 bufs
                 + 2 * w.size * 2                       # weight block (bf16)
                 + 2 * coutp * 4                        # bias block
                 + 2 * pp * coutp * x_nchw.dtype.itemsize)   # output block
    scratch_bytes = 4 * ((hout + 1) * (wp + 1) * cin
                         + (hout + 1) * wp * cin
                         + hout * (wp + 1) * cin)
    tmp_bytes = pp * 9 * cin * 2 + pp * coutp * 4 + 6 * hout * wp * cin * 4
    vmem_limit = int(min(64 << 20,
                         max(16 << 20, 2 * (blk_bytes + scratch_bytes + tmp_bytes))))

    # TODO(synk): for large feature maps (v7x: 64 MiB physical VMEM) add a
    #             second "parallel" grid axis over output-row blocks with a
    #             1-row halo on the odd-row parity planes and per-block
    #             top/bottom border masks; one image per step is fine here.
    out_flat = pl.pallas_call(
        _make_aconv_kernel(wr, fuse_k),
        out_shape=jax.ShapeDtypeStruct((n, pp, coutp), x_nchw.dtype),
        grid=(n,),
        in_specs=[
            pl.BlockSpec((4, hout, wp, cin), lambda b: (b, 0, 0, 0)),
            w_spec,
            pl.BlockSpec((1, coutp), lambda b: (0, 0)),
        ],
        out_specs=pl.BlockSpec((1, pp, coutp), lambda b: (b, 0, 0)),
        scratch_shapes=[
            pltpu.VMEM((hout + 1, wp + 1, cin), jnp.float32),   # pee
            pltpu.VMEM((hout + 1, wp, cin), jnp.float32),       # peo
            pltpu.VMEM((hout, wp + 1, cin), jnp.float32),       # poe
        ],
        compiler_params=pltpu.CompilerParams(
            dimension_semantics=("parallel",),
            vmem_limit_bytes=vmem_limit),
    )(xp, w, b2)

    out = out_flat[:, :, :cout].reshape(n, hout, wp, cout)[:, :, :wr, :]
    # TODO(synk): if the consumer is channels-last, return NHWC (and/or bf16)
    #             here and drop this transpose to save an HBM pass.
    return jnp.transpose(out, (0, 3, 1, 2))


# ------------------------------ Reference ----------------------------------- #

def aconv_reference(x_nchw, weight, gamma, beta, run_mean, run_var, eps=1e-3):
    x = x_nchw
    pooled = 0.25 * (x[:, :, :-1, :-1] + x[:, :, 1:, :-1]
                     + x[:, :, :-1, 1:] + x[:, :, 1:, 1:])
    y = jax.lax.conv_general_dilated(
        pooled, weight, window_strides=(2, 2), padding=((1, 1), (1, 1)),
        dimension_numbers=("NCHW", "OIHW", "NCHW"),
        precision=jax.lax.Precision.HIGHEST)
    scale = (gamma / jnp.sqrt(run_var + eps)).reshape(1, -1, 1, 1)
    bias = (beta - run_mean * (gamma / jnp.sqrt(run_var + eps))).reshape(1, -1, 1, 1)
    y = y * scale + bias
    return y * jax.nn.sigmoid(y)


# -------------------------------- Main -------------------------------------- #

if __name__ == "__main__":
    def run_case(case_key, n, cin, h, w, cout):
        k1, k2, k3, k4, k5, k6 = jax.random.split(case_key, 6)
        x = jax.random.normal(k1, (n, cin, h, w), jnp.float32)
        conv_w = 0.1 * jax.random.normal(k2, (cout, cin, 3, 3), jnp.float32)
        gamma = 1.0 + 0.1 * jax.random.normal(k3, (cout,), jnp.float32)
        beta = 0.1 * jax.random.normal(k4, (cout,), jnp.float32)
        mean = 0.1 * jax.random.normal(k5, (cout,), jnp.float32)
        var = 1.0 + 0.1 * jnp.abs(jax.random.normal(k6, (cout,), jnp.float32))

        out = jax.block_until_ready(
            aconv_forward(x, conv_w, gamma, beta, mean, var))
        ref = aconv_reference(x, conv_w, gamma, beta, mean, var)
        assert out.shape == ref.shape, (out.shape, ref.shape)
        # Inputs / matmul operands are bf16 (f32 accumulation), hence the
        # loosened tolerance vs. a pure-f32 reference.
        np.testing.assert_allclose(np.asarray(out), np.asarray(ref),
                                   rtol=2e-2, atol=3e-2)

    key = jax.random.PRNGKey(0)
    k_a, k_b = jax.random.split(key)
    run_case(k_a, n=2, cin=4, h=16, w=16, cout=8)    # primary demo shape
    run_case(k_b, n=1, cin=3, h=12, w=20, cout=5)    # exercises Wout padding path

    print("KERNEL_OK")
</pallas_src>

<mosaic_0001>
module attributes {stable_mosaic.version = 11 : i64} {
  func.func @kernel(%arg0: i32, %arg1: memref<4x8x8x4xbf16, #tpu.memory_space<vmem>>, %arg2: memref<36x128xbf16, #tpu.memory_space<vmem>>, %arg3: memref<1x128xf32, #tpu.memory_space<vmem>>, %arg4: memref<1x64x128xf32, #tpu.memory_space<vmem>>, %arg5: memref<9x9x4xf32, #tpu.memory_space<vmem>>, %arg6: memref<9x8x4xf32, #tpu.memory_space<vmem>>, %arg7: memref<8x9x4xf32, #tpu.memory_space<vmem>>) attributes {dimension_semantics = [#tpu.dimension_semantics<parallel>], iteration_bounds = array<i64: 2>, scalar_prefetch = 0 : i64, scratch_operands = 3 : i64, tpu.core_type = #tpu.core_type<tc>, window_params = [{transform_indices = @transform_0, window_bounds = array<i64: 4, 8, 8, 4>}, {pipeline_mode = #tpu.pipeline_mode<synchronous>, transform_indices = @transform_1, window_bounds = array<i64: 36, 128>}, {pipeline_mode = #tpu.pipeline_mode<synchronous>, transform_indices = @transform_2, window_bounds = array<i64: 1, 128>}, {transform_indices = @transform_3, window_bounds = array<i64: 1, 64, 128>}]} {
    %c0 = arith.constant 0 : index
    %c0_0 = arith.constant 0 : index
    %c0_1 = arith.constant 0 : index
    %c0_2 = arith.constant 0 : index
    %0 = vector.load %arg1[%c0, %c0_0, %c0_1, %c0_2] : memref<4x8x8x4xbf16, #tpu.memory_space<vmem>>, vector<1x8x8x4xbf16>
    %1 = vector.shape_cast %0 : vector<1x8x8x4xbf16> to vector<8x8x4xbf16>
    %2 = arith.extf %1 : vector<8x8x4xbf16> to vector<8x8x4xf32>
    %c1 = arith.constant 1 : index
    %c0_3 = arith.constant 0 : index
    %c0_4 = arith.constant 0 : index
    %c0_5 = arith.constant 0 : index
    %3 = vector.load %arg1[%c1, %c0_3, %c0_4, %c0_5] : memref<4x8x8x4xbf16, #tpu.memory_space<vmem>>, vector<1x8x8x4xbf16>
    %4 = vector.shape_cast %3 : vector<1x8x8x4xbf16> to vector<8x8x4xbf16>
    %5 = arith.extf %4 : vector<8x8x4xbf16> to vector<8x8x4xf32>
    %c2 = arith.constant 2 : index
    %c0_6 = arith.constant 0 : index
    %c0_7 = arith.constant 0 : index
    %c0_8 = arith.constant 0 : index
    %6 = vector.load %arg1[%c2, %c0_6, %c0_7, %c0_8] : memref<4x8x8x4xbf16, #tpu.memory_space<vmem>>, vector<1x8x8x4xbf16>
    %7 = vector.shape_cast %6 : vector<1x8x8x4xbf16> to vector<8x8x4xbf16>
    %8 = arith.extf %7 : vector<8x8x4xbf16> to vector<8x8x4xf32>
    %c3 = arith.constant 3 : index
    %c0_9 = arith.constant 0 : index
    %c0_10 = arith.constant 0 : index
    %c0_11 = arith.constant 0 : index
    %9 = vector.load %arg1[%c3, %c0_9, %c0_10, %c0_11] : memref<4x8x8x4xbf16, #tpu.memory_space<vmem>>, vector<1x8x8x4xbf16>
    %10 = vector.shape_cast %9 : vector<1x8x8x4xbf16> to vector<8x8x4xbf16>
    %11 = arith.extf %10 : vector<8x8x4xbf16> to vector<8x8x4xf32>
    %12 = arith.addf %2, %5 : vector<8x8x4xf32>
    %13 = arith.addf %12, %8 : vector<8x8x4xf32>
    %14 = arith.addf %13, %11 : vector<8x8x4xf32>
    %cst = arith.constant 2.500000e-01 : f32
    %15 = vector.broadcast %cst : f32 to vector<8x8x4xf32>
    %16 = arith.mulf %15, %14 : vector<8x8x4xf32>
    %cst_12 = arith.constant 0.000000e+00 : f32
    %17 = vector.broadcast %cst_12 : f32 to vector<8x1x4xf32>
    %c0_13 = arith.constant 0 : index
    %c0_14 = arith.constant 0 : index
    %c0_15 = arith.constant 0 : index
    %18 = vector.load %arg7[%c0_13, %c0_14, %c0_15] : memref<8x9x4xf32, #tpu.memory_space<vmem>>, vector<8x1x4xf32>
    tpu.vector_store %arg7[%c0_13, %c0_14, %c0_15], %17 {strides = array<i32>} : memref<8x9x4xf32, #tpu.memory_space<vmem>>, vector<8x1x4xf32>,
    %cst_16 = arith.constant 0.000000e+00 : f32
    %19 = vector.broadcast %cst_16 : f32 to vector<8x1x4xf32>
    %c0_17 = arith.constant 0 : index
    %c8 = arith.constant 8 : index
    %c0_18 = arith.constant 0 : index
    %20 = vector.load %arg7[%c0_17, %c8, %c0_18] : memref<8x9x4xf32, #tpu.memory_space<vmem>>, vector<8x1x4xf32>
    tpu.vector_store %arg7[%c0_17, %c8, %c0_18], %19 {strides = array<i32>} : memref<8x9x4xf32, #tpu.memory_space<vmem>>, vector<8x1x4xf32>,
    %21 = vector.extract_strided_slice %5 {offsets = [0, 0, 0], sizes = [8, 7, 4], strides = [1, 1, 1]} : vector<8x8x4xf32> to vector<8x7x4xf32>
    %22 = vector.extract_strided_slice %11 {offsets = [0, 0, 0], sizes = [8, 7, 4], strides = [1, 1, 1]} : vector<8x8x4xf32> to vector<8x7x4xf32>
    %23 = arith.addf %21, %22 : vector<8x7x4xf32>
    %24 = vector.extract_strided_slice %2 {offsets = [0, 1, 0], sizes = [8, 7, 4], strides = [1, 1, 1]} : vector<8x8x4xf32> to vector<8x7x4xf32>
    %25 = arith.addf %23, %24 : vector<8x7x4xf32>
    %26 = vector.extract_strided_slice %8 {offsets = [0, 1, 0], sizes = [8, 7, 4], strides = [1, 1, 1]} : vector<8x8x4xf32> to vector<8x7x4xf32>
    %27 = arith.addf %25, %26 : vector<8x7x4xf32>
    %cst_19 = arith.constant 2.500000e-01 : f32
    %28 = vector.broadcast %cst_19 : f32 to vector<8x7x4xf32>
    %29 = arith.mulf %28, %27 : vector<8x7x4xf32>
    %c0_20 = arith.constant 0 : index
    %c1_21 = arith.constant 1 : index
    %c0_22 = arith.constant 0 : index
    %30 = vector.load %arg7[%c0_20, %c1_21, %c0_22] : memref<8x9x4xf32, #tpu.memory_space<vmem>>, vector<8x7x4xf32>
    tpu.vector_store %arg7[%c0_20, %c1_21, %c0_22], %29 {strides = array<i32>} : memref<8x9x4xf32, #tpu.memory_space<vmem>>, vector<8x7x4xf32>,
    %cst_23 = arith.constant 0.000000e+00 : f32
    %31 = vector.broadcast %cst_23 : f32 to vector<1x8x4xf32>
    %c0_24 = arith.constant 0 : index
    %c0_25 = arith.constant 0 : index
    %c0_26 = arith.constant 0 : index
    %32 = vector.load %arg6[%c0_24, %c0_25, %c0_26] : memref<9x8x4xf32, #tpu.memory_space<vmem>>, vector<1x8x4xf32>
    tpu.vector_store %arg6[%c0_24, %c0_25, %c0_26], %31 {strides = array<i32>} : memref<9x8x4xf32, #tpu.memory_space<vmem>>, vector<1x8x4xf32>,
    %cst_27 = arith.constant 0.000000e+00 : f32
    %33 = vector.broadcast %cst_27 : f32 to vector<1x8x4xf32>
    %c8_28 = arith.constant 8 : index
    %c0_29 = arith.constant 0 : index
    %c0_30 = arith.constant 0 : index
    %34 = vector.load %arg6[%c8_28, %c0_29, %c0_30] : memref<9x8x4xf32, #tpu.memory_space<vmem>>, vector<1x8x4xf32>
    tpu.vector_store %arg6[%c8_28, %c0_29, %c0_30], %33 {strides = array<i32>} : memref<9x8x4xf32, #tpu.memory_space<vmem>>, vector<1x8x4xf32>,
    %35 = vector.extract_strided_slice %8 {offsets = [0, 0, 0], sizes = [7, 8, 4], strides = [1, 1, 1]} : vector<8x8x4xf32> to vector<7x8x4xf32>
    %36 = vector.extract_strided_slice %11 {offsets = [0, 0, 0], sizes = [7, 8, 4], strides = [1, 1, 1]} : vector<8x8x4xf32> to vector<7x8x4xf32>
    %37 = arith.addf %35, %36 : vector<7x8x4xf32>
    %38 = vector.extract_strided_slice %2 {offsets = [1, 0, 0], sizes = [7, 8, 4], strides = [1, 1, 1]} : vector<8x8x4xf32> to vector<7x8x4xf32>
    %39 = arith.addf %37, %38 : vector<7x8x4xf32>
    %40 = vector.extract_strided_slice %5 {offsets = [1, 0, 0], sizes = [7, 8, 4], strides = [1, 1, 1]} : vector<8x8x4xf32> to vector<7x8x4xf32>
    %41 = arith.addf %39, %40 : vector<7x8x4xf32>
    %cst_31 = arith.constant 2.500000e-01 : f32
    %42 = vector.broadcast %cst_31 : f32 to vector<7x8x4xf32>
    %43 = arith.mulf %42, %41 : vector<7x8x4xf32>
    %c1_32 = arith.constant 1 : index
    %c0_33 = arith.constant 0 : index
    %c0_34 = arith.constant 0 : index
    %44 = vector.load %arg6[%c1_32, %c0_33, %c0_34] : memref<9x8x4xf32, #tpu.memory_space<vmem>>, vector<7x8x4xf32>
    tpu.vector_store %arg6[%c1_32, %c0_33, %c0_34], %43 {strides = array<i32>} : memref<9x8x4xf32, #tpu.memory_space<vmem>>, vector<7x8x4xf32>,
    %cst_35 = arith.constant 0.000000e+00 : f32
    %45 = vector.broadcast %cst_35 : f32 to vector<1x9x4xf32>
    %c0_36 = arith.constant 0 : index
    %c0_37 = arith.constant 0 : index
    %c0_38 = arith.constant 0 : index
    %46 = vector.load %arg5[%c0_36, %c0_37, %c0_38] : memref<9x9x4xf32, #tpu.memory_space<vmem>>, vector<1x9x4xf32>
    tpu.vector_store %arg5[%c0_36, %c0_37, %c0_38], %45 {strides = array<i32>} : memref<9x9x4xf32, #tpu.memory_space<vmem>>, vector<1x9x4xf32>,
    %cst_39 = arith.constant 0.000000e+00 : f32
    %47 = vector.broadcast %cst_39 : f32 to vector<1x9x4xf32>
    %c8_40 = arith.constant 8 : index
    %c0_41 = arith.constant 0 : index
    %c0_42 = arith.constant 0 : index
    %48 = vector.load %arg5[%c8_40, %c0_41, %c0_42] : memref<9x9x4xf32, #tpu.memory_space<vmem>>, vector<1x9x4xf32>
    tpu.vector_store %arg5[%c8_40, %c0_41, %c0_42], %47 {strides = array<i32>} : memref<9x9x4xf32, #tpu.memory_space<vmem>>, vector<1x9x4xf32>,
    %cst_43 = arith.constant 0.000000e+00 : f32
    %49 = vector.broadcast %cst_43 : f32 to vector<9x1x4xf32>
    %c0_44 = arith.constant 0 : index
    %c0_45 = arith.constant 0 : index
    %c0_46 = arith.constant 0 : index
    %50 = vector.load %arg5[%c0_44, %c0_45, %c0_46] : memref<9x9x4xf32, #tpu.memory_space<vmem>>, vector<9x1x4xf32>
    tpu.vector_store %arg5[%c0_44, %c0_45, %c0_46], %49 {strides = array<i32>} : memref<9x9x4xf32, #tpu.memory_space<vmem>>, vector<9x1x4xf32>,
    %cst_47 = arith.constant 0.000000e+00 : f32
    %51 = vector.broadcast %cst_47 : f32 to vector<9x1x4xf32>
    %c0_48 = arith.constant 0 : index
    %c8_49 = arith.constant 8 : index
    %c0_50 = arith.constant 0 : index
    %52 = vector.load %arg5[%c0_48, %c8_49, %c0_50] : memref<9x9x4xf32, #tpu.memory_space<vmem>>, vector<9x1x4xf32>
    tpu.vector_store %arg5[%c0_48, %c8_49, %c0_50], %51 {strides = array<i32>} : memref<9x9x4xf32, #tpu.memory_space<vmem>>, vector<9x1x4xf32>,
    %53 = vector.extract_strided_slice %11 {offsets = [0, 0, 0], sizes = [7, 7, 4], strides = [1, 1, 1]} : vector<8x8x4xf32> to vector<7x7x4xf32>
    %54 = vector.extract_strided_slice %5 {offsets = [1, 0, 0], sizes = [7, 7, 4], strides = [1, 1, 1]} : vector<8x8x4xf32> to vector<7x7x4xf32>
    %55 = arith.addf %53, %54 : vector<7x7x4xf32>
    %56 = vector.extract_strided_slice %8 {offsets = [0, 1, 0], sizes = [7, 7, 4], strides = [1, 1, 1]} : vector<8x8x4xf32> to vector<7x7x4xf32>
    %57 = arith.addf %55, %56 : vector<7x7x4xf32>
    %58 = vector.extract_strided_slice %2 {offsets = [1, 1, 0], sizes = [7, 7, 4], strides = [1, 1, 1]} : vector<8x8x4xf32> to vector<7x7x4xf32>
    %59 = arith.addf %57, %58 : vector<7x7x4xf32>
    %cst_51 = arith.constant 2.500000e-01 : f32
    %60 = vector.broadcast %cst_51 : f32 to vector<7x7x4xf32>
    %61 = arith.mulf %60, %59 : vector<7x7x4xf32>
    %c1_52 = arith.constant 1 : index
    %c1_53 = arith.constant 1 : index
    %c0_54 = arith.constant 0 : index
    %62 = vector.load %arg5[%c1_52, %c1_53, %c0_54] : memref<9x9x4xf32, #tpu.memory_space<vmem>>, vector<7x7x4xf32>
    tpu.vector_store %arg5[%c1_52, %c1_53, %c0_54], %61 {strides = array<i32>} : memref<9x9x4xf32, #tpu.memory_space<vmem>>, vector<7x7x4xf32>,
    %c0_55 = arith.constant 0 : index
    %c0_56 = arith.constant 0 : index
    %c0_57 = arith.constant 0 : index
    %63 = vector.load %arg5[%c0_55, %c0_56, %c0_57] : memref<9x9x4xf32, #tpu.memory_space<vmem>>, vector<8x8x4xf32>
    %c0_58 = arith.constant 0 : index
    %c0_59 = arith.constant 0 : index
    %c0_60 = arith.constant 0 : index
    %64 = vector.load %arg6[%c0_58, %c0_59, %c0_60] : memref<9x8x4xf32, #tpu.memory_space<vmem>>, vector<8x8x4xf32>
    %c0_61 = arith.constant 0 : index
    %c1_62 = arith.constant 1 : index
    %c0_63 = arith.constant 0 : index
    %65 = vector.load %arg5[%c0_61, %c1_62, %c0_63] : memref<9x9x4xf32, #tpu.memory_space<vmem>>, vector<8x8x4xf32>
    %c0_64 = arith.constant 0 : index
    %c0_65 = arith.constant 0 : index
    %c0_66 = arith.constant 0 : index
    %66 = vector.load %arg7[%c0_64, %c0_65, %c0_66] : memref<8x9x4xf32, #tpu.memory_space<vmem>>, vector<8x8x4xf32>
    %c0_67 = arith.constant 0 : index
    %c1_68 = arith.constant 1 : index
    %c0_69 = arith.constant 0 : index
    %67 = vector.load %arg7[%c0_67, %c1_68, %c0_69] : memref<8x9x4xf32, #tpu.memory_space<vmem>>, vector<8x8x4xf32>
    %c1_70 = arith.constant 1 : index
    %c0_71 = arith.constant 0 : index
    %c0_72 = arith.constant 0 : index
    %68 = vector.load %arg5[%c1_70, %c0_71, %c0_72] : memref<9x9x4xf32, #tpu.memory_space<vmem>>, vector<8x8x4xf32>
    %c1_73 = arith.constant 1 : index
    %c0_74 = arith.constant 0 : index
    %c0_75 = arith.constant 0 : index
    %69 = vector.load %arg6[%c1_73, %c0_74, %c0_75] : memref<9x8x4xf32, #tpu.memory_space<vmem>>, vector<8x8x4xf32>
    %c1_76 = arith.constant 1 : index
    %c1_77 = arith.constant 1 : index
    %c0_78 = arith.constant 0 : index
    %70 = vector.load %arg5[%c1_76, %c1_77, %c0_78] : memref<9x9x4xf32, #tpu.memory_space<vmem>>, vector<8x8x4xf32>
    %71 = vector.shape_cast %63 : vector<8x8x4xf32> to vector<64x4xf32>
    %72 = arith.truncf %71 : vector<64x4xf32> to vector<64x4xbf16>
    %73 = vector.shape_cast %64 : vector<8x8x4xf32> to vector<64x4xf32>
    %74 = arith.truncf %73 : vector<64x4xf32> to vector<64x4xbf16>
    %75 = vector.shape_cast %65 : vector<8x8x4xf32> to vector<64x4xf32>
    %76 = arith.truncf %75 : vector<64x4xf32> to vector<64x4xbf16>
    %77 = vector.shape_cast %66 : vector<8x8x4xf32> to vector<64x4xf32>
    %78 = arith.truncf %77 : vector<64x4xf32> to vector<64x4xbf16>
    %79 = vector.shape_cast %16 : vector<8x8x4xf32> to vector<64x4xf32>
    %80 = arith.truncf %79 : vector<64x4xf32> to vector<64x4xbf16>
    %81 = vector.shape_cast %67 : vector<8x8x4xf32> to vector<64x4xf32>
    %82 = arith.truncf %81 : vector<64x4xf32> to vector<64x4xbf16>
    %83 = vector.shape_cast %68 : vector<8x8x4xf32> to vector<64x4xf32>
    %84 = arith.truncf %83 : vector<64x4xf32> to vector<64x4xbf16>
    %85 = vector.shape_cast %69 : vector<8x8x4xf32> to vector<64x4xf32>
    %86 = arith.truncf %85 : vector<64x4xf32> to vector<64x4xbf16>
    %87 = vector.shape_cast %70 : vector<8x8x4xf32> to vector<64x4xf32>
    %88 = arith.truncf %87 : vector<64x4xf32> to vector<64x4xbf16>
    %89 = tpu.concatenate %72, %74, %76, %78, %80, %82, %84, %86, %88 in 1 : vector<64x4xbf16>, vector<64x4xbf16>, vector<64x4xbf16>, vector<64x4xbf16>, vector<64x4xbf16>, vector<64x4xbf16>, vector<64x4xbf16>, vector<64x4xbf16>, vector<64x4xbf16> -> vector<64x36xbf16>
    %c0_79 = arith.constant 0 : index
    %c0_80 = arith.constant 0 : index
    %90 = vector.load %arg2[%c0_79, %c0_80] : memref<36x128xbf16, #tpu.memory_space<vmem>>, vector<36x128xbf16>
    %cst_81 = arith.constant dense<0.000000e+00> : vector<64x128xf32>
    %91 = tpu.matmul %89, %90, %cst_81 {dimension_numbers = #tpu.dot_dimension_numbers<[1], [0], [0], [1], [0, 0, 1, 1], [], []>} : vector<64x36xbf16>, vector<36x128xbf16>, vector<64x128xf32> -> vector<64x128xf32>
    %c0_82 = arith.constant 0 : index
    %c0_83 = arith.constant 0 : index
    %92 = vector.load %arg3[%c0_82, %c0_83] : memref<1x128xf32, #tpu.memory_space<vmem>>, vector<1x128xf32>
    %93 = vector.broadcast %92 : vector<1x128xf32> to vector<64x128xf32>
    %94 = arith.addf %91, %93 : vector<64x128xf32>
    %cst_84 = arith.constant 0.000000e+00 : f32
    %95 = vector.broadcast %cst_84 : f32 to vector<64x128xf32>
    %96 = arith.subf %95, %94 : vector<64x128xf32>
    %97 = math.exp %96 : vector<64x128xf32>
    %cst_85 = arith.constant 1.000000e+00 : f32
    %98 = vector.broadcast %cst_85 : f32 to vector<64x128xf32>
    %99 = arith.addf %98, %97 : vector<64x128xf32>
    %100 = tpu.reciprocal %99 {approx = true} : vector<64x128xf32> -> vector<64x128xf32>
    %101 = arith.mulf %94, %100 : vector<64x128xf32>
    %c0_86 = arith.constant 0 : index
    %c0_87 = arith.constant 0 : index
    %c0_88 = arith.constant 0 : index
    %102 = vector.load %arg4[%c0_86, %c0_87, %c0_88] : memref<1x64x128xf32, #tpu.memory_space<vmem>>, vector<1x64x128xf32>
    %103 = vector.shape_cast %102 : vector<1x64x128xf32> to vector<64x128xf32>
    %104 = vector.shape_cast %101 : vector<64x128xf32> to vector<1x64x128xf32>
    tpu.vector_store %arg4[%c0_86, %c0_87, %c0_88], %104 {strides = array<i32>} : memref<1x64x128xf32, #tpu.memory_space<vmem>>, vector<1x64x128xf32>,
    return
  }
  func.func @transform_0(%arg0: i32) -> (i32, i32, i32, i32) {
    %c0_i32 = arith.constant 0 : i32
    %c0_i32_0 = arith.constant 0 : i32
    %c0_i32_1 = arith.constant 0 : i32
    %c0_i32_2 = arith.constant 0 : i32
    return %arg0, %c0_i32, %c0_i32_0, %c0_i32_1 : i32, i32, i32, i32
  }
  func.func @transform_1(%arg0: i32) -> (i32, i32) {
    %c0_i32 = arith.constant 0 : i32
    %c0_i32_0 = arith.constant 0 : i32
    %c0_i32_1 = arith.constant 0 : i32
    return %c0_i32, %c0_i32_0 : i32, i32
  }
  func.func @transform_2(%arg0: i32) -> (i32, i32) {
    %c0_i32 = arith.constant 0 : i32
    %c0_i32_0 = arith.constant 0 : i32
    %c0_i32_1 = arith.constant 0 : i32
    return %c0_i32, %c0_i32_0 : i32, i32
  }
  func.func @transform_3(%arg0: i32) -> (i32, i32, i32) {
    %c0_i32 = arith.constant 0 : i32
    %c0_i32_0 = arith.constant 0 : i32
    %c0_i32_1 = arith.constant 0 : i32
    return %arg0, %c0_i32, %c0_i32_0 : i32, i32, i32
  }
}

</mosaic_0001>

<llo_original>
// kernel: tpu_custom_call.1
$region0: #{tpu_custom_call.1}
  #allocation0 [shape = 'u32[]', space=smem, size = 0x4, offset = 0x4, fixed_abs, tag = 'smem constant byte address 0x4 - core index']
  #allocation1 [shape = 'u32[72,128]{1,0:T(1,128)}', space=vmem, size = 0x9000, scoped, tag = 'internal scratch']
  #allocation2 [shape = 'f32[9,9,4]{2,1,0:T(8,128)}', space=vmem, size = 0x12000, scoped, tag = 'scratch operand']
  #allocation3 [shape = 'f32[9,8,4]{2,1,0:T(8,128)}', space=vmem, size = 0x9000, scoped, tag = 'scratch operand']
  #allocation4 [shape = 'f32[8,9,4]{2,1,0:T(8,128)}', space=vmem, size = 0x10000, scoped, tag = 'scratch operand']
  %s0 = inlined_call_operand.vmem [shape: bf16[8,8,8,4], index: 0, kind: input, shape index: {}]
  %s1 = inlined_call_operand.vmem [shape: bf16[36,128], index: 1, kind: input, shape index: {}]
  %s2 = inlined_call_operand.vmem [shape: f32[1,128], index: 2, kind: input, shape index: {}]
  %s3 = inlined_call_operand.hbm [shape: f32[2,64,128], index: 3, kind: output, shape index: {}]
  %s4 = sld [smem:[#allocation0]]
  $region45: #{tpu_custom_call.1} parent=0
    _
  %s6 = ssub.s32 1, %s4
  %s7 = scalar_select 0, %s6, %s4
  $region1: #{tpu_custom_call.1} parent=0
    #allocation5 [shape = 'u8[65536]{0}', space=vmem, size = 0x10000, scoped, tag = 'output window, operand 0']
    #allocation6 [shape = 's32[2]{0}', space=sflag, size = 0x8, scoped, tag = 'scoped memory for tpu_custom_call.1']
    %8 = vsyncpa [#allocation6], 0
    %s9 = scalar_lea.sflag [#allocation6], 1
    %10 = vsyncpa %s9, 0
    loop: start=0, step=1, limit=4
    $region2: #{tpu_custom_call.1} parent=1 // loop_pre_header
      _
    $region3: #{tpu_custom_call.1} parent=1 // loop_header
      %s12 = sphi 0, %s16
      %p13 = scmp.ge.s32.totalorder %s12, 4
      %s22 = sphi 0, %s24
      %s25 = sphi 0, %s22
      %s26 = sphi 0, %s25
      %s42 = sphi 0, %s26
      %s46 = sphi 0, %s46
      %s48 = sphi 0, %s46
      %s49 = sphi 0, %s48
      %s63 = sphi 0, %s49
      %s67 = sphi 0, %s67
      %s69 = sphi 0, %s67
      %s70 = sphi 0, %s69
      %s84 = sphi 0, %s70
      %s90 = sphi 0, %s92
      %s93 = sphi 0, %s90
      %s94 = sphi 0, %s93
      %s110 = sphi 0, %s94
    $region4: #{tpu_custom_call.1} parent=1 // loop_header_branch
      %15 = sbr.rel (%p13) target = $region8
    $region5: #{tpu_custom_call.1} parent=1 // loop_body
      %s17 = ssub.s32 %s12, 1
      %s18 = ssub.s32 %s12, 2
      %s19 = sadd.s32 %s12, 1
      %s20 = ssub.s32 %s12, %s19
      %p21 = scmp.eq.s32.totalorder %s20, 0
      %s23 = sadd.s32 %s22, 1
      %s24 = scalar_select %p21, %s22, %s23
      %p27 = pneg %p21
      %p28 = scmp.eq.s32.totalorder %s12, 1
      %p29 = por %p27, %p28
      %p30 = scmp.ne.s32.totalorder %s22, %s25
      %p31 = scmp.eq.s32.totalorder %s12, 0
      %p32 = por %p30, %p31
      %p33 = scmp.ne.s32.totalorder %s22, %s25
      %p34 = scmp.eq.s32.totalorder %s17, 1
      %p35 = por %p33, %p34
      %p36 = scmp.ne.s32.totalorder %s25, %s26
      %p37 = scmp.eq.s32.totalorder %s17, 0
      %p38 = por %p36, %p37
      %p39 = scmp.ne.s32.totalorder %s25, %s26
      %p40 = scmp.eq.s32.totalorder %s18, 1
      %p41 = por %p39, %p40
      %p43 = scmp.ne.s32.totalorder %s26, %s42
      %p44 = scmp.eq.s32.totalorder %s18, 0
      %p45 = por %p43, %p44
      %s47 = sadd.s32 %s46, 1
      %p50 = scmp.eq.s32.totalorder %s12, 1
      %p51 = scmp.ne.s32.totalorder %s46, %s48
      %p52 = scmp.eq.s32.totalorder %s12, 0
      %p53 = por %p51, %p52
      %p54 = scmp.ne.s32.totalorder %s46, %s48
      %p55 = scmp.eq.s32.totalorder %s17, 1
      %p56 = por %p54, %p55
      %p57 = scmp.ne.s32.totalorder %s48, %s49
      %p58 = scmp.eq.s32.totalorder %s17, 0
      %p59 = por %p57, %p58
      %p60 = scmp.ne.s32.totalorder %s48, %s49
      %p61 = scmp.eq.s32.totalorder %s18, 1
      %p62 = por %p60, %p61
      %p64 = scmp.ne.s32.totalorder %s49, %s63
      %p65 = scmp.eq.s32.totalorder %s18, 0
      %p66 = por %p64, %p65
      %s68 = sadd.s32 %s67, 1
      %p71 = scmp.eq.s32.totalorder %s12, 1
      %p72 = scmp.ne.s32.totalorder %s67, %s69
      %p73 = scmp.eq.s32.totalorder %s12, 0
      %p74 = por %p72, %p73
      %p75 = scmp.ne.s32.totalorder %s67, %s69
      %p76 = scmp.eq.s32.totalorder %s17, 1
      %p77 = por %p75, %p76
      %p78 = scmp.ne.s32.totalorder %s69, %s70
      %p79 = scmp.eq.s32.totalorder %s17, 0
      %p80 = por %p78, %p79
      %p81 = scmp.ne.s32.totalorder %s69, %s70
      %p82 = scmp.eq.s32.totalorder %s18, 1
      %p83 = por %p81, %p82
      %p85 = scmp.ne.s32.totalorder %s70, %s84
      %p86 = scmp.eq.s32.totalorder %s18, 0
      %p87 = por %p85, %p86
      %s88 = ssub.s32 %s12, %s19
      %p89 = scmp.eq.s32.totalorder %s88, 0
      %s91 = sadd.s32 %s90, 1
      %s92 = scalar_select %p89, %s90, %s91
      %p95 = pneg %p89
      %p96 = scmp.eq.s32.totalorder %s12, 1
      %p97 = por %p95, %p96
      %p98 = scmp.ne.s32.totalorder %s90, %s93
      %p99 = scmp.eq.s32.totalorder %s12, 0
      %p100 = por %p98, %p99
      %p101 = scmp.ne.s32.totalorder %s90, %s93
      %p102 = scmp.eq.s32.totalorder %s17, 1
      %p103 = por %p101, %p102
      %p104 = scmp.ne.s32.totalorder %s93, %s94
      %p105 = scmp.eq.s32.totalorder %s17, 0
      %p106 = por %p104, %p105
      %p107 = scmp.ne.s32.totalorder %s93, %s94
      %p108 = scmp.eq.s32.totalorder %s18, 1
      %p109 = por %p107, %p108
      %p111 = scmp.ne.s32.totalorder %s94, %s110
      %p112 = scmp.eq.s32.totalorder %s18, 0
      %p113 = por %p111, %p112
      %p114 = scmp.le.s32.totalorder 1, %s12
      %p115 = scmp.lt.s32.totalorder %s12, 3
      %p116 = pnand %p114, %p115
      %p117 = pneg %p116
      // Predicated region
      $region9: #{tpu_custom_call.1} parent=5 // pred_check
        _
      $region10: #{tpu_custom_call.1} parent=5 // pred_check_branch
        %119 = sbr.rel (%p116) target = $region12
      $region11: #{tpu_custom_call.1} parent=5 // pred_region
        %s120 = ssub.s32 %s12, 1
        // Predicated region
        $region13: #{tpu_custom_call.1} parent=11 // pred_check
          %p121 = pneg %p59
        $region14: #{tpu_custom_call.1} parent=11 // pred_check_branch
          %123 = sbr.rel (%p121) target = $region16
        $region15: #{tpu_custom_call.1} parent=11 // pred_region
          _
        $region16: #{tpu_custom_call.1} parent=11 // pred_fallthru
          _
        // Predicated region
        $region17: #{tpu_custom_call.1} parent=11 // pred_check
          %p124 = pneg %p80
        $region18: #{tpu_custom_call.1} parent=11 // pred_check_branch
          %126 = sbr.rel (%p124) target = $region20
        $region19: #{tpu_custom_call.1} parent=11 // pred_region
          _
        $region20: #{tpu_custom_call.1} parent=11 // pred_fallthru
          _
      $region12: #{tpu_custom_call.1} parent=5 // pred_fallthru
        _
      %p127 = scmp.lt.s32.totalorder %s12, 2
      // Predicated region
      $region21: #{tpu_custom_call.1} parent=5 // pred_check
        %p128 = pneg %p127
      $region22: #{tpu_custom_call.1} parent=5 // pred_check_branch
        %130 = sbr.rel (%p128) target = $region24
      $region23: #{tpu_custom_call.1} parent=5 // pred_region
        // Predicated region
        $region25: #{tpu_custom_call.1} parent=23 // pred_check
          %p131 = pneg %p32
        $region26: #{tpu_custom_call.1} parent=23 // pred_check_branch
          %133 = sbr.rel (%p131) target = $region28
        $region27: #{tpu_custom_call.1} parent=23 // pred_region
          %s134 = smul.u32 4, %s12
          %p135 = scmp.lt.s32.totalorder %s134, 7
          %s136 = scalar_select %p135, %s134, 7
          %s137 = smul.addr %s136, 8
          %s138 = smul.addr %s137, 4
          %s139 = scalar_lea.vmem %s0, %s138
          %s140 = smul.u32 4, %s12
        $region28: #{tpu_custom_call.1} parent=23 // pred_fallthru
          _
      $region24: #{tpu_custom_call.1} parent=5 // pred_fallthru
        _
      %p141 = scmp.le.s32.totalorder 1, %s12
      %p142 = scmp.lt.s32.totalorder %s12, 3
      %p143 = pnand %p141, %p142
      %p144 = pneg %p143
      // Predicated region
      $region29: #{tpu_custom_call.1} parent=5 // pred_check
        _
      $region30: #{tpu_custom_call.1} parent=5 // pred_check_branch
        %146 = sbr.rel (%p143) target = $region32
      $region31: #{tpu_custom_call.1} parent=5 // pred_region
        %s147 = ssub.s32 %s12, 1
        %s148 = smul.u32 4, %s17
        %p149 = scmp.lt.s32.totalorder %s148, 7
        %s150 = scalar_select %p149, %s148, 7
        %s151 = smul.addr %s150, 8
        %s152 = smul.addr %s151, 4
        %s153 = scalar_lea.vmem %s0, %s152
        %p154 = pneg %p38
        %p155 = pneg %p35
        %p156 = pneg %p59
        %p157 = pneg %p56
        %p158 = pneg %p80
        %p159 = pneg %p77
        %p160 = pneg %p106
        %p161 = pneg %p103
        %s162 = sand.u32 %s93, 1
        %s163 = scalar_lea.sflag [#allocation6], %s162
        %s164 = sand.u32 %s93, 1
        %s165 = smul.addr %s164, 64
        %s166 = scalar_lea.vmem [#allocation5], %s165
        %s167 = smul.u32 4, %s17
        %p168 = scmp.lt.s32.totalorder %s167, 7
        %s169 = scalar_select %p168, %s167, 7
        %s170 = smul.addr %s169, 8
        %s171 = smul.addr %s170, 4
        %s172 = scalar_lea.vmem %s0, %s171
        %s173 = smul.u32 4, %s17
        %v175 = vld [vmem:[%s172] sm:$0xf]
        %v176 = vld [vmem:[%s172 + $0x4] sm:$0xf]
        %v177 = vld [vmem:[%s172 + $0x8] sm:$0xf]
        %v178 = vld [vmem:[%s172 + $0xc] sm:$0xf]
        %v179 = vld [vmem:[%s172 + $0x10] sm:$0xf]
        %v180 = vld [vmem:[%s172 + $0x14] sm:$0xf]
        %v181 = vld [vmem:[%s172 + $0x18] sm:$0xf]
        %v182 = vld [vmem:[%s172 + $0x1c] sm:$0xf]
        %v183 = vunpack.c.l.bf16 %v175
        %v184 = vunpack.c.l.bf16 %v176
        %v185 = vunpack.c.l.bf16 %v177
        %v186 = vunpack.c.l.bf16 %v178
        %v187 = vunpack.c.l.bf16 %v179
        %v188 = vunpack.c.l.bf16 %v180
        %v189 = vunpack.c.l.bf16 %v181
        %v190 = vunpack.c.l.bf16 %v182
        %s191 = scalar_lea.vmem %s172, 32
        %v192 = vld [vmem:[%s191] sm:$0xf]
        %v193 = vld [vmem:[%s191 + $0x4] sm:$0xf]
        %v194 = vld [vmem:[%s191 + $0x8] sm:$0xf]
        %v195 = vld [vmem:[%s191 + $0xc] sm:$0xf]
        %v196 = vld [vmem:[%s191 + $0x10] sm:$0xf]
        %v197 = vld [vmem:[%s191 + $0x14] sm:$0xf]
        %v198 = vld [vmem:[%s191 + $0x18] sm:$0xf]
        %v199 = vld [vmem:[%s191 + $0x1c] sm:$0xf]
        %v200 = vunpack.c.l.bf16 %v192
        %v201 = vunpack.c.l.bf16 %v193
        %v202 = vunpack.c.l.bf16 %v194
        %v203 = vunpack.c.l.bf16 %v195
        %v204 = vunpack.c.l.bf16 %v196
        %v205 = vunpack.c.l.bf16 %v197
        %v206 = vunpack.c.l.bf16 %v198
        %v207 = vunpack.c.l.bf16 %v199
        %s208 = scalar_lea.vmem %s172, 64
        %v209 = vld [vmem:[%s208] sm:$0xf]
        %v210 = vld [vmem:[%s208 + $0x4] sm:$0xf]
        %v211 = vld [vmem:[%s208 + $0x8] sm:$0xf]
        %v212 = vld [vmem:[%s208 + $0xc] sm:$0xf]
        %v213 = vld [vmem:[%s208 + $0x10] sm:$0xf]
        %v214 = vld [vmem:[%s208 + $0x14] sm:$0xf]
        %v215 = vld [vmem:[%s208 + $0x18] sm:$0xf]
        %v216 = vld [vmem:[%s208 + $0x1c] sm:$0xf]
        %v217 = vunpack.c.l.bf16 %v209
        %v218 = vunpack.c.l.bf16 %v210
        %v219 = vunpack.c.l.bf16 %v211
        %v220 = vunpack.c.l.bf16 %v212
        %v221 = vunpack.c.l.bf16 %v213
        %v222 = vunpack.c.l.bf16 %v214
        %v223 = vunpack.c.l.bf16 %v215
        %v224 = vunpack.c.l.bf16 %v216
        %s225 = scalar_lea.vmem %s172, 96
        %v226 = vld [vmem:[%s225] sm:$0xf]
        %v227 = vld [vmem:[%s225 + $0x4] sm:$0xf]
        %v228 = vld [vmem:[%s225 + $0x8] sm:$0xf]
        %v229 = vld [vmem:[%s225 + $0xc] sm:$0xf]
        %v230 = vld [vmem:[%s225 + $0x10] sm:$0xf]
        %v231 = vld [vmem:[%s225 + $0x14] sm:$0xf]
        %v232 = vld [vmem:[%s225 + $0x18] sm:$0xf]
        %v233 = vld [vmem:[%s225 + $0x1c] sm:$0xf]
        %v234 = vunpack.c.l.bf16 %v226
        %v235 = vunpack.c.l.bf16 %v227
        %v236 = vunpack.c.l.bf16 %v228
        %v237 = vunpack.c.l.bf16 %v229
        %v238 = vunpack.c.l.bf16 %v230
        %v239 = vunpack.c.l.bf16 %v231
        %v240 = vunpack.c.l.bf16 %v232
        %v241 = vunpack.c.l.bf16 %v233
        %v242 = vadd.f32 %v183, %v200
        %v243 = vadd.f32 %v184, %v201
        %v244 = vadd.f32 %v185, %v202
        %v245 = vadd.f32 %v186, %v203
        %v246 = vadd.f32 %v187, %v204
        %v247 = vadd.f32 %v188, %v205
        %v248 = vadd.f32 %v189, %v206
        %v249 = vadd.f32 %v190, %v207
        %v250 = vadd.f32 %v242, %v217
        %v251 = vadd.f32 %v243, %v218
        %v252 = vadd.f32 %v244, %v219
        %v253 = vadd.f32 %v245, %v220
        %v254 = vadd.f32 %v246, %v221
        %v255 = vadd.f32 %v247, %v222
        %v256 = vadd.f32 %v248, %v223
        %v257 = vadd.f32 %v249, %v224
        %v258 = vadd.f32 %v250, %v234
        %v259 = vadd.f32 %v251, %v235
        %v260 = vadd.f32 %v252, %v236
        %v261 = vadd.f32 %v253, %v237
        %v262 = vadd.f32 %v254, %v238
        %v263 = vadd.f32 %v255, %v239
        %v264 = vadd.f32 %v256, %v240
        %v265 = vadd.f32 %v257, %v241
        %v266 = vmul.f32 %v258, 0.25
        %v267 = vmul.f32 %v259, 0.25
        %v268 = vmul.f32 %v260, 0.25
        %v269 = vmul.f32 %v261, 0.25
        %v270 = vmul.f32 %v262, 0.25
        %v271 = vmul.f32 %v263, 0.25
        %v272 = vmul.f32 %v264, 0.25
        %v273 = vmul.f32 %v265, 0.25
        %vm274 = vcmask 24576
        %275 = vst.msk [vmem:[#allocation4] sm:$0x1] %vm274, 0.0
        %276 = vst.msk [vmem:[#allocation4 + $0x10] sm:$0x1] %vm274, 0.0
        %277 = vst.msk [vmem:[#allocation4 + $0x20] sm:$0x1] %vm274, 0.0
        %278 = vst.msk [vmem:[#allocation4 + $0x30] sm:$0x1] %vm274, 0.0
        %279 = vst.msk [vmem:[#allocation4 + $0x40] sm:$0x1] %vm274, 0.0
        %280 = vst.msk [vmem:[#allocation4 + $0x50] sm:$0x1] %vm274, 0.0
        %281 = vst.msk [vmem:[#allocation4 + $0x60] sm:$0x1] %vm274, 0.0
        %282 = vst.msk [vmem:[#allocation4 + $0x70] sm:$0x1] %vm274, 0.0
        %283 = vst.msk [vmem:[#allocation4 + $0x8] sm:$0x1] %vm274, 0.0
        %284 = vst.msk [vmem:[#allocation4 + $0x18] sm:$0x1] %vm274, 0.0
        %285 = vst.msk [vmem:[#allocation4 + $0x28] sm:$0x1] %vm274, 0.0
        %286 = vst.msk [vmem:[#allocation4 + $0x38] sm:$0x1] %vm274, 0.0
        %287 = vst.msk [vmem:[#allocation4 + $0x48] sm:$0x1] %vm274, 0.0
        %288 = vst.msk [vmem:[#allocation4 + $0x58] sm:$0x1] %vm274, 0.0
        %289 = vst.msk [vmem:[#allocation4 + $0x68] sm:$0x1] %vm274, 0.0
        %290 = vst.msk [vmem:[#allocation4 + $0x78] sm:$0x1] %vm274, 0.0
        %v291 = vadd.f32 %v200, %v234
        %v292 = vadd.f32 %v201, %v235
        %v293 = vadd.f32 %v202, %v236
        %v294 = vadd.f32 %v203, %v237
        %v295 = vadd.f32 %v204, %v238
        %v296 = vadd.f32 %v205, %v239
        %v297 = vadd.f32 %v206, %v240
        %v298 = vadd.f32 %v207, %v241
        %v307 = vrot.slane %v183, 1
        %v308 = vrot.slane %v184, 1
        %v309 = vrot.slane %v185, 1
        %v310 = vrot.slane %v186, 1
        %v311 = vrot.slane %v187, 1
        %v312 = vrot.slane %v188, 1
        %v313 = vrot.slane %v189, 1
        %v314 = vrot.slane %v190, 1
        %v323 = vadd.f32 %v291, %v307
        %v324 = vadd.f32 %v292, %v308
        %v325 = vadd.f32 %v293, %v309
        %v326 = vadd.f32 %v294, %v310
        %v327 = vadd.f32 %v295, %v311
        %v328 = vadd.f32 %v296, %v312
        %v329 = vadd.f32 %v297, %v313
        %v330 = vadd.f32 %v298, %v314
        %v339 = vrot.slane %v217, 1
        %v340 = vrot.slane %v218, 1
        %v341 = vrot.slane %v219, 1
        %v342 = vrot.slane %v220, 1
        %v343 = vrot.slane %v221, 1
        %v344 = vrot.slane %v222, 1
        %v345 = vrot.slane %v223, 1
        %v346 = vrot.slane %v224, 1
        %v355 = vadd.f32 %v323, %v339
        %v356 = vadd.f32 %v324, %v340
        %v357 = vadd.f32 %v325, %v341
        %v358 = vadd.f32 %v326, %v342
        %v359 = vadd.f32 %v327, %v343
        %v360 = vadd.f32 %v328, %v344
        %v361 = vadd.f32 %v329, %v345
        %v362 = vadd.f32 %v330, %v346
        %v363 = vmul.f32 %v355, 0.25
        %v364 = vmul.f32 %v356, 0.25
        %v365 = vmul.f32 %v357, 0.25
        %v366 = vmul.f32 %v358, 0.25
        %v367 = vmul.f32 %v359, 0.25
        %v368 = vmul.f32 %v360, 0.25
        %v369 = vmul.f32 %v361, 0.25
        %v370 = vmul.f32 %v362, 0.25
        %vm371 = vcmask 30720
        %372 = vst.msk [vmem:[#allocation4 + $0x1] sm:$0x7f] %vm371, %v363
        %373 = vst.msk [vmem:[#allocation4 + $0x11] sm:$0x7f] %vm371, %v364
        %374 = vst.msk [vmem:[#allocation4 + $0x21] sm:$0x7f] %vm371, %v365
        %375 = vst.msk [vmem:[#allocation4 + $0x31] sm:$0x7f] %vm371, %v366
        %376 = vst.msk [vmem:[#allocation4 + $0x41] sm:$0x7f] %vm371, %v367
        %377 = vst.msk [vmem:[#allocation4 + $0x51] sm:$0x7f] %vm371, %v368
        %378 = vst.msk [vmem:[#allocation4 + $0x61] sm:$0x7f] %vm371, %v369
        %379 = vst.msk [vmem:[#allocation4 + $0x71] sm:$0x7f] %vm371, %v370
        %vm380 = vcmask 31744
        %381 = vst.msk [vmem:[#allocation3] sm:$0xff] %vm380, 0.0
        %s382 = scalar_lea.vmem [#allocation3], 64
        %383 = vst.msk [vmem:[%s382] sm:$0xff] %vm380, 0.0
        %v384 = vadd.f32 %v217, %v234
        %v385 = vadd.f32 %v218, %v235
        %v386 = vadd.f32 %v219, %v236
        %v387 = vadd.f32 %v220, %v237
        %v388 = vadd.f32 %v221, %v238
        %v389 = vadd.f32 %v222, %v239
        %v390 = vadd.f32 %v223, %v240
        %v391 = vadd.f32 %v384, %v184
        %v392 = vadd.f32 %v385, %v185
        %v393 = vadd.f32 %v386, %v186
        %v394 = vadd.f32 %v387, %v187
        %v395 = vadd.f32 %v388, %v188
        %v396 = vadd.f32 %v389, %v189
        %v397 = vadd.f32 %v390, %v190
        %v398 = vadd.f32 %v391, %v201
        %v399 = vadd.f32 %v392, %v202
        %v400 = vadd.f32 %v393, %v203
        %v401 = vadd.f32 %v394, %v204
        %v402 = vadd.f32 %v395, %v205
        %v403 = vadd.f32 %v396, %v206
        %v404 = vadd.f32 %v397, %v207
        %v405 = vmul.f32 %v398, 0.25
        %v406 = vmul.f32 %v399, 0.25
        %v407 = vmul.f32 %v400, 0.25
        %v408 = vmul.f32 %v401, 0.25
        %v409 = vmul.f32 %v402, 0.25
        %v410 = vmul.f32 %v403, 0.25
        %v411 = vmul.f32 %v404, 0.25
        %s412 = scalar_lea.vmem [#allocation3], 8
        %413 = vst.msk [vmem:[%s412] sm:$0xff] %vm380, %v405
        %414 = vst.msk [vmem:[%s412 + $0x8] sm:$0xff] %vm380, %v406
        %415 = vst.msk [vmem:[%s412 + $0x10] sm:$0xff] %vm380, %v407
        %416 = vst.msk [vmem:[%s412 + $0x18] sm:$0xff] %vm380, %v408
        %417 = vst.msk [vmem:[%s412 + $0x20] sm:$0xff] %vm380, %v409
        %418 = vst.msk [vmem:[%s412 + $0x28] sm:$0xff] %vm380, %v410
        %419 = vst.msk [vmem:[%s412 + $0x30] sm:$0xff] %vm380, %v411
        %420 = vst.msk [vmem:[#allocation2] sm:$0xff] %vm380, 0.0
        %421 = vst.msk [vmem:[#allocation2 + $0x8] sm:$0x1] %vm274, 0.0
        %s422 = scalar_lea.vmem [#allocation2], 128
        %423 = vst.msk [vmem:[%s422] sm:$0xff] %vm380, 0.0
        %424 = vst.msk [vmem:[%s422 + $0x8] sm:$0x1] %vm274, 0.0
        %425 = vst.msk [vmem:[#allocation2] sm:$0x1] %vm274, 0.0
        %426 = vst.msk [vmem:[#allocation2 + $0x10] sm:$0x1] %vm274, 0.0
        %427 = vst.msk [vmem:[#allocation2 + $0x20] sm:$0x1] %vm274, 0.0
        %428 = vst.msk [vmem:[#allocation2 + $0x30] sm:$0x1] %vm274, 0.0
        %429 = vst.msk [vmem:[#allocation2 + $0x40] sm:$0x1] %vm274, 0.0
        %430 = vst.msk [vmem:[#allocation2 + $0x50] sm:$0x1] %vm274, 0.0
        %431 = vst.msk [vmem:[#allocation2 + $0x60] sm:$0x1] %vm274, 0.0
        %432 = vst.msk [vmem:[#allocation2 + $0x70] sm:$0x1] %vm274, 0.0
        %433 = vst.msk [vmem:[#allocation2 + $0x80] sm:$0x1] %vm274, 0.0
        %434 = vst.msk [vmem:[#allocation2 + $0x8] sm:$0x1] %vm274, 0.0
        %435 = vst.msk [vmem:[#allocation2 + $0x18] sm:$0x1] %vm274, 0.0
        %436 = vst.msk [vmem:[#allocation2 + $0x28] sm:$0x1] %vm274, 0.0
        %437 = vst.msk [vmem:[#allocation2 + $0x38] sm:$0x1] %vm274, 0.0
        %438 = vst.msk [vmem:[#allocation2 + $0x48] sm:$0x1] %vm274, 0.0
        %439 = vst.msk [vmem:[#allocation2 + $0x58] sm:$0x1] %vm274, 0.0
        %440 = vst.msk [vmem:[#allocation2 + $0x68] sm:$0x1] %vm274, 0.0
        %441 = vst.msk [vmem:[#allocation2 + $0x78] sm:$0x1] %vm274, 0.0
        %442 = vst.msk [vmem:[#allocation2 + $0x88] sm:$0x1] %vm274, 0.0
        %v443 = vadd.f32 %v234, %v201
        %v444 = vadd.f32 %v235, %v202
        %v445 = vadd.f32 %v236, %v203
        %v446 = vadd.f32 %v237, %v204
        %v447 = vadd.f32 %v238, %v205
        %v448 = vadd.f32 %v239, %v206
        %v449 = vadd.f32 %v240, %v207
        %v450 = vadd.f32 %v443, %v339
        %v451 = vadd.f32 %v444, %v340
        %v452 = vadd.f32 %v445, %v341
        %v453 = vadd.f32 %v446, %v342
        %v454 = vadd.f32 %v447, %v343
        %v455 = vadd.f32 %v448, %v344
        %v456 = vadd.f32 %v449, %v345
        %v457 = vadd.f32 %v450, %v308
        %v458 = vadd.f32 %v451, %v309
        %v459 = vadd.f32 %v452, %v310
        %v460 = vadd.f32 %v453, %v311
        %v461 = vadd.f32 %v454, %v312
        %v462 = vadd.f32 %v455, %v313
        %v463 = vadd.f32 %v456, %v314
        %v464 = vmul.f32 %v457, 0.25
        %v465 = vmul.f32 %v458, 0.25
        %v466 = vmul.f32 %v459, 0.25
        %v467 = vmul.f32 %v460, 0.25
        %v468 = vmul.f32 %v461, 0.25
        %v469 = vmul.f32 %v462, 0.25
        %v470 = vmul.f32 %v463, 0.25
        %s471 = scalar_lea.vmem [#allocation2], 16
        %472 = vst.msk [vmem:[%s471 + $0x1] sm:$0x7f] %vm371, %v464
        %473 = vst.msk [vmem:[%s471 + $0x11] sm:$0x7f] %vm371, %v465
        %474 = vst.msk [vmem:[%s471 + $0x21] sm:$0x7f] %vm371, %v466
        %475 = vst.msk [vmem:[%s471 + $0x31] sm:$0x7f] %vm371, %v467
        %476 = vst.msk [vmem:[%s471 + $0x41] sm:$0x7f] %vm371, %v468
        %477 = vst.msk [vmem:[%s471 + $0x51] sm:$0x7f] %vm371, %v469
        %478 = vst.msk [vmem:[%s471 + $0x61] sm:$0x7f] %vm371, %v470
        %v479 = vld [vmem:[#allocation2] sm:$0xff]
        %v480 = vld [vmem:[#allocation2 + $0x10] sm:$0xff]
        %v481 = vld [vmem:[#allocation2 + $0x20] sm:$0xff]
        %v482 = vld [vmem:[#allocation2 + $0x30] sm:$0xff]
        %v483 = vld [vmem:[#allocation2 + $0x40] sm:$0xff]
        %v484 = vld [vmem:[#allocation2 + $0x50] sm:$0xff]
        %v485 = vld [vmem:[#allocation2 + $0x60] sm:$0xff]
        %v486 = vld [vmem:[#allocation2 + $0x70] sm:$0xff]
        %v487 = vld [vmem:[#allocation3] sm:$0xff]
        %v488 = vld [vmem:[#allocation3 + $0x8] sm:$0xff]
        %v489 = vld [vmem:[#allocation3 + $0x10] sm:$0xff]
        %v490 = vld [vmem:[#allocation3 + $0x18] sm:$0xff]
        %v491 = vld [vmem:[#allocation3 + $0x20] sm:$0xff]
        %v492 = vld [vmem:[#allocation3 + $0x28] sm:$0xff]
        %v493 = vld [vmem:[#allocation3 + $0x30] sm:$0xff]
        %v494 = vld [vmem:[#allocation3 + $0x38] sm:$0xff]
        %v495 = vld [vmem:[#allocation2 + $0x1] sm:$0xff]
        %v496 = vld [vmem:[#allocation2 + $0x11] sm:$0xff]
        %v497 = vld [vmem:[#allocation2 + $0x21] sm:$0xff]
        %v498 = vld [vmem:[#allocation2 + $0x31] sm:$0xff]
        %v499 = vld [vmem:[#allocation2 + $0x41] sm:$0xff]
        %v500 = vld [vmem:[#allocation2 + $0x51] sm:$0xff]
        %v501 = vld [vmem:[#allocation2 + $0x61] sm:$0xff]
        %v502 = vld [vmem:[#allocation2 + $0x71] sm:$0xff]
        %v503 = vld [vmem:[#allocation4] sm:$0xff]
        %v504 = vld [vmem:[#allocation4 + $0x10] sm:$0xff]
        %v505 = vld [vmem:[#allocation4 + $0x20] sm:$0xff]
        %v506 = vld [vmem:[#allocation4 + $0x30] sm:$0xff]
        %v507 = vld [vmem:[#allocation4 + $0x40] sm:$0xff]
        %v508 = vld [vmem:[#allocation4 + $0x50] sm:$0xff]
        %v509 = vld [vmem:[#allocation4 + $0x60] sm:$0xff]
        %v510 = vld [vmem:[#allocation4 + $0x70] sm:$0xff]
        %v511 = vld [vmem:[#allocation4 + $0x1] sm:$0xff]
        %v512 = vld [vmem:[#allocation4 + $0x11] sm:$0xff]
        %v513 = vld [vmem:[#allocation4 + $0x21] sm:$0xff]
        %v514 = vld [vmem:[#allocation4 + $0x31] sm:$0xff]
        %v515 = vld [vmem:[#allocation4 + $0x41] sm:$0xff]
        %v516 = vld [vmem:[#allocation4 + $0x51] sm:$0xff]
        %v517 = vld [vmem:[#allocation4 + $0x61] sm:$0xff]
        %v518 = vld [vmem:[#allocation4 + $0x71] sm:$0xff]
        %v519 = vld [vmem:[%s471] sm:$0xff]
        %v520 = vld [vmem:[%s471 + $0x10] sm:$0xff]
        %v521 = vld [vmem:[%s471 + $0x20] sm:$0xff]
        %v522 = vld [vmem:[%s471 + $0x30] sm:$0xff]
        %v523 = vld [vmem:[%s471 + $0x40] sm:$0xff]
        %v524 = vld [vmem:[%s471 + $0x50] sm:$0xff]
        %v525 = vld [vmem:[%s471 + $0x60] sm:$0xff]
        %v526 = vld [vmem:[%s471 + $0x70] sm:$0xff]
        %v527 = vld [vmem:[%s412] sm:$0xff]
        %v528 = vld [vmem:[%s412 + $0x8] sm:$0xff]
        %v529 = vld [vmem:[%s412 + $0x10] sm:$0xff]
        %v530 = vld [vmem:[%s412 + $0x18] sm:$0xff]
        %v531 = vld [vmem:[%s412 + $0x20] sm:$0xff]
        %v532 = vld [vmem:[%s412 + $0x28] sm:$0xff]
        %v533 = vld [vmem:[%s412 + $0x30] sm:$0xff]
        %v534 = vld [vmem:[%s412 + $0x38] sm:$0xff]
        %v535 = vld [vmem:[%s471 + $0x1] sm:$0xff]
        %v536 = vld [vmem:[%s471 + $0x11] sm:$0xff]
        %v537 = vld [vmem:[%s471 + $0x21] sm:$0xff]
        %v538 = vld [vmem:[%s471 + $0x31] sm:$0xff]
        %v539 = vld [vmem:[%s471 + $0x41] sm:$0xff]
        %v540 = vld [vmem:[%s471 + $0x51] sm:$0xff]
        %v541 = vld [vmem:[%s471 + $0x61] sm:$0xff]
        %v542 = vld [vmem:[%s471 + $0x71] sm:$0xff]
        %v543 = vpack.c.bf16 %v479, %v479
        %v544 = vpack.c.bf16 %v480, %v480
        %v545 = vpack.c.bf16 %v481, %v481
        %v546 = vpack.c.bf16 %v482, %v482
        %v547 = vpack.c.bf16 %v483, %v483
        %v548 = vpack.c.bf16 %v484, %v484
        %v549 = vpack.c.bf16 %v485, %v485
        %v550 = vpack.c.bf16 %v486, %v486
        %v551 = vpack.c.bf16 %v487, %v487
        %v552 = vpack.c.bf16 %v488, %v488
        %v553 = vpack.c.bf16 %v489, %v489
        %v554 = vpack.c.bf16 %v490, %v490
        %v555 = vpack.c.bf16 %v491, %v491
        %v556 = vpack.c.bf16 %v492, %v492
        %v557 = vpack.c.bf16 %v493, %v493
        %v558 = vpack.c.bf16 %v494, %v494
        %v559 = vpack.c.bf16 %v495, %v495
        %v560 = vpack.c.bf16 %v496, %v496
        %v561 = vpack.c.bf16 %v497, %v497
        %v562 = vpack.c.bf16 %v498, %v498
        %v563 = vpack.c.bf16 %v499, %v499
        %v564 = vpack.c.bf16 %v500, %v500
        %v565 = vpack.c.bf16 %v501, %v501
        %v566 = vpack.c.bf16 %v502, %v502
        %v567 = vpack.c.bf16 %v503, %v503
        %v568 = vpack.c.bf16 %v504, %v504
        %v569 = vpack.c.bf16 %v505, %v505
        %v570 = vpack.c.bf16 %v506, %v506
        %v571 = vpack.c.bf16 %v507, %v507
        %v572 = vpack.c.bf16 %v508, %v508
        %v573 = vpack.c.bf16 %v509, %v509
        %v574 = vpack.c.bf16 %v510, %v510
        %v575 = vpack.c.bf16 %v266, %v266
        %v576 = vpack.c.bf16 %v267, %v267
        %v577 = vpack.c.bf16 %v268, %v268
        %v578 = vpack.c.bf16 %v269, %v269
        %v579 = vpack.c.bf16 %v270, %v270
        %v580 = vpack.c.bf16 %v271, %v271
        %v581 = vpack.c.bf16 %v272, %v272
        %v582 = vpack.c.bf16 %v273, %v273
        %v583 = vpack.c.bf16 %v511, %v511
        %v584 = vpack.c.bf16 %v512, %v512
        %v585 = vpack.c.bf16 %v513, %v513
        %v586 = vpack.c.bf16 %v514, %v514
        %v587 = vpack.c.bf16 %v515, %v515
        %v588 = vpack.c.bf16 %v516, %v516
        %v589 = vpack.c.bf16 %v517, %v517
        %v590 = vpack.c.bf16 %v518, %v518
        %v591 = vpack.c.bf16 %v519, %v519
        %v592 = vpack.c.bf16 %v520, %v520
        %v593 = vpack.c.bf16 %v521, %v521
        %v594 = vpack.c.bf16 %v522, %v522
        %v595 = vpack.c.bf16 %v523, %v523
        %v596 = vpack.c.bf16 %v524, %v524
        %v597 = vpack.c.bf16 %v525, %v525
        %v598 = vpack.c.bf16 %v526, %v526
        %v599 = vpack.c.bf16 %v527, %v527
        %v600 = vpack.c.bf16 %v528, %v528
        %v601 = vpack.c.bf16 %v529, %v529
        %v602 = vpack.c.bf16 %v530, %v530
        %v603 = vpack.c.bf16 %v531, %v531
        %v604 = vpack.c.bf16 %v532, %v532
        %v605 = vpack.c.bf16 %v533, %v533
        %v606 = vpack.c.bf16 %v534, %v534
        %v607 = vpack.c.bf16 %v535, %v535
        %v608 = vpack.c.bf16 %v536, %v536
        %v609 = vpack.c.bf16 %v537, %v537
        %v610 = vpack.c.bf16 %v538, %v538
        %v611 = vpack.c.bf16 %v539, %v539
        %v612 = vpack.c.bf16 %v540, %v540
        %v613 = vpack.c.bf16 %v541, %v541
        %v614 = vpack.c.bf16 %v542, %v542
        %v623 = vunpack.c.l.b16 %v543
        %v624 = vunpack.c.l.b16 %v544
        %v625 = vunpack.c.l.b16 %v545
        %v626 = vunpack.c.l.b16 %v546
        %v627 = vunpack.c.l.b16 %v547
        %v628 = vunpack.c.l.b16 %v548
        %v629 = vunpack.c.l.b16 %v549
        %v630 = vunpack.c.l.b16 %v550
        %v631 = vpack.c.b16 %v624, %v623
        %v632 = vpack.c.b16 %v626, %v625
        %v633 = vpack.c.b16 %v628, %v627
        %v634 = vpack.c.b16 %v630, %v629
        %v643 = vunpack.c.l.b16 %v551
        %v644 = vunpack.c.l.b16 %v552
        %v645 = vunpack.c.l.b16 %v553
        %v646 = vunpack.c.l.b16 %v554
        %v647 = vunpack.c.l.b16 %v555
        %v648 = vunpack.c.l.b16 %v556
        %v649 = vunpack.c.l.b16 %v557
        %v650 = vunpack.c.l.b16 %v558
        %v651 = vpack.c.b16 %v644, %v643
        %v652 = vpack.c.b16 %v646, %v645
        %v653 = vpack.c.b16 %v648, %v647
        %v654 = vpack.c.b16 %v650, %v649
        %655 = vrot.lane.b32.xlu0 %v651, 4
        %v656 = vpop.permute.xlu0 %655
        %657 = vrot.lane.b32.xlu0 %v652, 4
        %v658 = vpop.permute.xlu0 %657
        %659 = vrot.lane.b32.xlu0 %v653, 4
        %v660 = vpop.permute.xlu0 %659
        %661 = vrot.lane.b32.xlu0 %v654, 4
        %v662 = vpop.permute.xlu0 %661
        %v671 = vunpack.c.l.b16 %v559
        %v672 = vunpack.c.l.b16 %v560
        %v673 = vunpack.c.l.b16 %v561
        %v674 = vunpack.c.l.b16 %v562
        %v675 = vunpack.c.l.b16 %v563
        %v676 = vunpack.c.l.b16 %v564
        %v677 = vunpack.c.l.b16 %v565
        %v678 = vunpack.c.l.b16 %v566
        %v679 = vpack.c.b16 %v672, %v671
        %v680 = vpack.c.b16 %v674, %v673
        %v681 = vpack.c.b16 %v676, %v675
        %v682 = vpack.c.b16 %v678, %v677
        %683 = vrot.lane.b32.xlu0 %v679, 8
        %v684 = vpop.permute.xlu0 %683
        %685 = vrot.lane.b32.xlu0 %v680, 8
        %v686 = vpop.permute.xlu0 %685
        %687 = vrot.lane.b32.xlu0 %v681, 8
        %v688 = vpop.permute.xlu0 %687
        %689 = vrot.lane.b32.xlu0 %v682, 8
        %v690 = vpop.permute.xlu0 %689
        %v699 = vunpack.c.l.b16 %v567
        %v700 = vunpack.c.l.b16 %v568
        %v701 = vunpack.c.l.b16 %v569
        %v702 = vunpack.c.l.b16 %v570
        %v703 = vunpack.c.l.b16 %v571
        %v704 = vunpack.c.l.b16 %v572
        %v705 = vunpack.c.l.b16 %v573
        %v706 = vunpack.c.l.b16 %v574
        %v707 = vpack.c.b16 %v700, %v699
        %v708 = vpack.c.b16 %v702, %v701
        %v709 = vpack.c.b16 %v704, %v703
        %v710 = vpack.c.b16 %v706, %v705
        %711 = vrot.lane.b32.xlu0 %v707, 12
        %v712 = vpop.permute.xlu0 %711
        %713 = vrot.lane.b32.xlu0 %v708, 12
        %v714 = vpop.permute.xlu0 %713
        %715 = vrot.lane.b32.xlu0 %v709, 12
        %v716 = vpop.permute.xlu0 %715
        %717 = vrot.lane.b32.xlu0 %v710, 12
        %v718 = vpop.permute.xlu0 %717
        %v727 = vunpack.c.l.b16 %v575
        %v728 = vunpack.c.l.b16 %v576
        %v729 = vunpack.c.l.b16 %v577
        %v730 = vunpack.c.l.b16 %v578
        %v731 = vunpack.c.l.b16 %v579
        %v732 = vunpack.c.l.b16 %v580
        %v733 = vunpack.c.l.b16 %v581
        %v734 = vunpack.c.l.b16 %v582
        %v735 = vpack.c.b16 %v728, %v727
        %v736 = vpack.c.b16 %v730, %v729
        %v737 = vpack.c.b16 %v732, %v731
        %v738 = vpack.c.b16 %v734, %v733
        %739 = vrot.lane.b32.xlu0 %v735, 16
        %v740 = vpop.permute.xlu0 %739
        %741 = vrot.lane.b32.xlu0 %v736, 16
        %v742 = vpop.permute.xlu0 %741
        %743 = vrot.lane.b32.xlu0 %v737, 16
        %v744 = vpop.permute.xlu0 %743
        %745 = vrot.lane.b32.xlu0 %v738, 16
        %v746 = vpop.permute.xlu0 %745
        %v755 = vunpack.c.l.b16 %v583
        %v756 = vunpack.c.l.b16 %v584
        %v757 = vunpack.c.l.b16 %v585
        %v758 = vunpack.c.l.b16 %v586
        %v759 = vunpack.c.l.b16 %v587
        %v760 = vunpack.c.l.b16 %v588
        %v761 = vunpack.c.l.b16 %v589
        %v762 = vunpack.c.l.b16 %v590
        %v763 = vpack.c.b16 %v756, %v755
        %v764 = vpack.c.b16 %v758, %v757
        %v765 = vpack.c.b16 %v760, %v759
        %v766 = vpack.c.b16 %v762, %v761
        %767 = vrot.lane.b32.xlu0 %v763, 20
        %v768 = vpop.permute.xlu0 %767
        %769 = vrot.lane.b32.xlu0 %v764, 20
        %v770 = vpop.permute.xlu0 %769
        %771 = vrot.lane.b32.xlu0 %v765, 20
        %v772 = vpop.permute.xlu0 %771
        %773 = vrot.lane.b32.xlu0 %v766, 20
        %v774 = vpop.permute.xlu0 %773
        %v783 = vunpack.c.l.b16 %v591
        %v784 = vunpack.c.l.b16 %v592
        %v785 = vunpack.c.l.b16 %v593
        %v786 = vunpack.c.l.b16 %v594
        %v787 = vunpack.c.l.b16 %v595
        %v788 = vunpack.c.l.b16 %v596
        %v789 = vunpack.c.l.b16 %v597
        %v790 = vunpack.c.l.b16 %v598
        %v791 = vpack.c.b16 %v784, %v783
        %v792 = vpack.c.b16 %v786, %v785
        %v793 = vpack.c.b16 %v788, %v787
        %v794 = vpack.c.b16 %v790, %v789
        %795 = vrot.lane.b32.xlu0 %v791, 24
        %v796 = vpop.permute.xlu0 %795
        %797 = vrot.lane.b32.xlu0 %v792, 24
        %v798 = vpop.permute.xlu0 %797
        %799 = vrot.lane.b32.xlu0 %v793, 24
        %v800 = vpop.permute.xlu0 %799
        %801 = vrot.lane.b32.xlu0 %v794, 24
        %v802 = vpop.permute.xlu0 %801
        %v811 = vunpack.c.l.b16 %v599
        %v812 = vunpack.c.l.b16 %v600
        %v813 = vunpack.c.l.b16 %v601
        %v814 = vunpack.c.l.b16 %v602
        %v815 = vunpack.c.l.b16 %v603
        %v816 = vunpack.c.l.b16 %v604
        %v817 = vunpack.c.l.b16 %v605
        %v818 = vunpack.c.l.b16 %v606
        %v819 = vpack.c.b16 %v812, %v811
        %v820 = vpack.c.b16 %v814, %v813
        %v821 = vpack.c.b16 %v816, %v815
        %v822 = vpack.c.b16 %v818, %v817
        %823 = vrot.lane.b32.xlu0 %v819, 28
        %v824 = vpop.permute.xlu0 %823
        %825 = vrot.lane.b32.xlu0 %v820, 28
        %v826 = vpop.permute.xlu0 %825
        %827 = vrot.lane.b32.xlu0 %v821, 28
        %v828 = vpop.permute.xlu0 %827
        %829 = vrot.lane.b32.xlu0 %v822, 28
        %v830 = vpop.permute.xlu0 %829
        %v839 = vunpack.c.l.b16 %v607
        %v840 = vunpack.c.l.b16 %v608
        %v841 = vunpack.c.l.b16 %v609
        %v842 = vunpack.c.l.b16 %v610
        %v843 = vunpack.c.l.b16 %v611
        %v844 = vunpack.c.l.b16 %v612
        %v845 = vunpack.c.l.b16 %v613
        %v846 = vunpack.c.l.b16 %v614
        %v847 = vpack.c.b16 %v840, %v839
        %v848 = vpack.c.b16 %v842, %v841
        %v849 = vpack.c.b16 %v844, %v843
        %v850 = vpack.c.b16 %v846, %v845
        %851 = vrot.lane.b32.xlu0 %v847, 32
        %v852 = vpop.permute.xlu0 %851
        %853 = vrot.lane.b32.xlu0 %v848, 32
        %v854 = vpop.permute.xlu0 %853
        %855 = vrot.lane.b32.xlu0 %v849, 32
        %v856 = vpop.permute.xlu0 %855
        %857 = vrot.lane.b32.xlu0 %v850, 32
        %v858 = vpop.permute.xlu0 %857
        %v861 = vsel %vm380, %v631, %v656
        %v864 = vsel %vm380, %v632, %v658
        %v867 = vsel %vm380, %v633, %v660
        %v870 = vsel %vm380, %v634, %v662
        %vm871 = vcmask 64512
        %v873 = vsel %vm871, %v861, %v684
        %v875 = vsel %vm871, %v864, %v686
        %v877 = vsel %vm871, %v867, %v688
        %v879 = vsel %vm871, %v870, %v690
        %vm880 = vcmask 97280
        %v882 = vsel %vm880, %v873, %v712
        %v884 = vsel %vm880, %v875, %v714
        %v886 = vsel %vm880, %v877, %v716
        %v888 = vsel %vm880, %v879, %v718
        %vm889 = vcmask 130048
        %v891 = vsel %vm889, %v882, %v740
        %v893 = vsel %vm889, %v884, %v742
        %v895 = vsel %vm889, %v886, %v744
        %v897 = vsel %vm889, %v888, %v746
        %vm898 = vcmask 162816
        %v900 = vsel %vm898, %v891, %v768
        %v902 = vsel %vm898, %v893, %v770
        %v904 = vsel %vm898, %v895, %v772
        %v906 = vsel %vm898, %v897, %v774
        %vm907 = vcmask 195584
        %v909 = vsel %vm907, %v900, %v796
        %v911 = vsel %vm907, %v902, %v798
        %v913 = vsel %vm907, %v904, %v800
        %v915 = vsel %vm907, %v906, %v802
        %vm916 = vcmask 228352
        %v918 = vsel %vm916, %v909, %v824
        %v920 = vsel %vm916, %v911, %v826
        %v922 = vsel %vm916, %v913, %v828
        %v924 = vsel %vm916, %v915, %v830
        %vm925 = vcmask 261120
        %v927 = vsel %vm925, %v918, %v852
        %v929 = vsel %vm925, %v920, %v854
        %v931 = vsel %vm925, %v922, %v856
        %v933 = vsel %vm925, %v924, %v858
        %v934 = vld [vmem:[%s1] sm:$0xf]
        %v935 = vld [vmem:[%s1 + $0x4] sm:$0xf]
        %v936 = vld [vmem:[%s1 + $0x8] sm:$0xf]
        %v937 = vld [vmem:[%s1 + $0xc] sm:$0xf]
        %v938 = vld [vmem:[%s1 + $0x10] sm:$0x3]
        %v939 = vld [vmem:[%s2] sm:$0x1]
        %v941 = vperm.slane %v939, 0
        %v948 = vunpack.c.l.b16 %v934
        %v949 = vunpack.c.l.b16 %v935
        %v950 = vunpack.c.l.b16 %v936
        %v951 = vunpack.c.l.b16 %v937
        %v952 = vunpack.c.l.b16 %v938
        %v953 = vpack.c.b16 %v949, %v948
        %v954 = vpack.c.b16 %v951, %v950
        %v955 = vpack.c.b16 %v952, %v952
        %vm958 = vcmask 293888
        %v959 = vsel %vm958, %v927, 0
        %v961 = vsel %vm958, %v929, 0
        %v963 = vsel %vm958, %v931, 0
        %v965 = vsel %vm958, %v933, 0
        %vm967 = vcmask 1041408
        %v969 = vsel %vm967, %v955, 0
        %971 = vmatpush.bf16.msra.mxu0 0
        %972 = vmatpush.bf16.msra.mxu0 0
        %973 = vmatpush.bf16.msra.mxu0 0
        %974 = vmatpush.bf16.msra.mxu0 0
        %975 = vmatpush.bf16.msra.mxu0 0
        %976 = vmatpush.bf16.msra.mxu0 %v969
        %977 = vmatpush.bf16.msra.mxu0 %v954
        %978 = vmatpush.bf16.msra.mxu0 %v953
        %979 = vmatmul.bf16.gmra.mxu0 %v959
        %v980 = vpop.f32.mrf.mxu0
        %v981 = vadd.f32 %v941, %v980
        %v982 = vpop.f32.mrf.mxu0
        %v983 = vadd.f32 %v941, %v982
        %984 = vmatmul.bf16.gmra.mxu0 %v961
        %v985 = vpop.f32.mrf.mxu0
        %v986 = vadd.f32 %v941, %v985
        %v987 = vpop.f32.mrf.mxu0
        %v988 = vadd.f32 %v941, %v987
        %989 = vmatmul.bf16.gmra.mxu0 %v963
        %v990 = vpop.f32.mrf.mxu0
        %v991 = vadd.f32 %v941, %v990
        %v992 = vpop.f32.mrf.mxu0
        %v993 = vadd.f32 %v941, %v992
        %994 = vmatmul.bf16.gmra.mxu0 %v965
        %v995 = vpop.f32.mrf.mxu0
        %v996 = vadd.f32 %v941, %v995
        %v997 = vpop.f32.mrf.mxu0
        %v998 = vadd.f32 %v941, %v997
        %999 = vdwg.mxu0
        %v1000 = vsub.f32 0.0, %v981
        %v1001 = vsub.f32 0.0, %v983
        %v1002 = vsub.f32 0.0, %v986
        %v1003 = vsub.f32 0.0, %v988
        %v1004 = vsub.f32 0.0, %v991
        %v1005 = vsub.f32 0.0, %v993
        %v1006 = vsub.f32 0.0, %v996
        %v1007 = vsub.f32 0.0, %v998
        %v1008 = vmul.f32 %v1000, 1.442695
        %v1009 = vpow.pop %v1008
        %v1010 = vmul.f32 %v1001, 1.442695
        %v1011 = vpow.pop %v1010
        %v1012 = vmul.f32 %v1002, 1.442695
        %v1013 = vpow.pop %v1012
        %v1014 = vmul.f32 %v1003, 1.442695
        %v1015 = vpow.pop %v1014
        %v1016 = vmul.f32 %v1004, 1.442695
        %v1017 = vpow.pop %v1016
        %v1018 = vmul.f32 %v1005, 1.442695
        %v1019 = vpow.pop %v1018
        %v1020 = vmul.f32 %v1006, 1.442695
        %v1021 = vpow.pop %v1020
        %v1022 = vmul.f32 %v1007, 1.442695
        %v1023 = vpow.pop %v1022
        %v1024 = vadd.f32 %v1009, 1.0
        %v1025 = vadd.f32 %v1011, 1.0
        %v1026 = vadd.f32 %v1013, 1.0
        %v1027 = vadd.f32 %v1015, 1.0
        %v1028 = vadd.f32 %v1017, 1.0
        %v1029 = vadd.f32 %v1019, 1.0
        %v1030 = vadd.f32 %v1021, 1.0
        %v1031 = vadd.f32 %v1023, 1.0
        %v1032 = vrcp.pop %v1024
        %v1033 = vrcp.pop %v1025
        %v1034 = vrcp.pop %v1026
        %v1035 = vrcp.pop %v1027
        %v1036 = vrcp.pop %v1028
        %v1037 = vrcp.pop %v1029
        %v1038 = vrcp.pop %v1030
        %v1039 = vrcp.pop %v1031
        %v1040 = vmul.f32 %v981, %v1032
        %v1041 = vmul.f32 %v983, %v1033
        %v1042 = vmul.f32 %v986, %v1034
        %v1043 = vmul.f32 %v988, %v1035
        %v1044 = vmul.f32 %v991, %v1036
        %v1045 = vmul.f32 %v993, %v1037
        %v1046 = vmul.f32 %v996, %v1038
        %v1047 = vmul.f32 %v998, %v1039
        %1048 = vst [vmem:[%s166] sm:$0xff] %v1040
        %1049 = vst [vmem:[%s166 + $0x8] sm:$0xff] %v1041
        %1050 = vst [vmem:[%s166 + $0x10] sm:$0xff] %v1042
        %1051 = vst [vmem:[%s166 + $0x18] sm:$0xff] %v1043
        %1052 = vst [vmem:[%s166 + $0x20] sm:$0xff] %v1044
        %1053 = vst [vmem:[%s166 + $0x28] sm:$0xff] %v1045
        %1054 = vst [vmem:[%s166 + $0x30] sm:$0xff] %v1046
        %1055 = vst [vmem:[%s166 + $0x38] sm:$0xff] %v1047
        %s1056 = sand.u32 %s93, 1
        %s1057 = scalar_lea.sflag [#allocation6], %s1056
        %s1058 = sand.u32 %s93, 1
        %s1059 = smul.addr %s1058, 64
        %s1060 = scalar_lea.vmem [#allocation5], %s1059
        // Predicated region
        $region33: #{tpu_custom_call.1} parent=31 // pred_check
          %p1061 = pneg %p103
        $region34: #{tpu_custom_call.1} parent=31 // pred_check_branch
          %1063 = sbr.rel (%p1061) target = $region36
        $region35: #{tpu_custom_call.1} parent=31 // pred_region
          %1065 = vsyncadd %s1057, 0
          %s1066 = smul.addr %s17, 8
          %s1067 = smul.addr %s1066, 8
          %s1068 = scalar_lea.hbm %s3, %s1067
          %s1069 = sshll.u32 %s1060, 4
          %s1070 = int_to_ptr.vmem [resolvable:$true] %s1069
          %s1071 = sshll.u32 %s1068, 4
          %s1072 = int_to_ptr.hbm [resolvable:$true] %s1071
          %1077 = dma.vmem_to_hbm [thread:$0]  %s1070, 1024, %s1072, %s1057, 128, 128, 8
        $region36: #{tpu_custom_call.1} parent=31 // pred_fallthru
          _
      $region32: #{tpu_custom_call.1} parent=5 // pred_fallthru
        _
      %p1078 = scmp.le.s32.totalorder 2, %s12
      // Predicated region
      $region37: #{tpu_custom_call.1} parent=5 // pred_check
        %p1079 = pneg %p1078
      $region38: #{tpu_custom_call.1} parent=5 // pred_check_branch
        %1081 = sbr.rel (%p1079) target = $region40
      $region39: #{tpu_custom_call.1} parent=5 // pred_region
        %s1082 = ssub.s32 %s12, 2
        // Predicated region
        $region41: #{tpu_custom_call.1} parent=39 // pred_check
          %p1083 = pneg %p109
        $region42: #{tpu_custom_call.1} parent=39 // pred_check_branch
          %1085 = sbr.rel (%p1083) target = $region44
        $region43: #{tpu_custom_call.1} parent=39 // pred_region
          %s1086 = sand.u32 %s94, 1
          %s1087 = scalar_lea.sflag [#allocation6], %s1086
          %s1088 = sand.u32 %s94, 1
          %s1089 = smul.addr %s1088, 64
          %s1090 = scalar_lea.vmem [#allocation5], %s1089
          %1092 = dma.done %s1087, 1024
        $region44: #{tpu_custom_call.1} parent=39 // pred_fallthru
          _
      $region40: #{tpu_custom_call.1} parent=5 // pred_fallthru
        _
    $region6: #{tpu_custom_call.1} parent=1 // loop_footer
      %s16 = sadd.s32 1, %s12
    $region7: #{tpu_custom_call.1} parent=1 // loop_footer_branch
      %11 = sbr.rel target = $region3
    $region8: #{tpu_custom_call.1} parent=1 // loop_exit
      _
    %1093 = vsyncpa [#allocation6], 1
    %s1094 = scalar_lea.sflag [#allocation6], 1
    %1095 = vsyncpa %s1094, 1

</llo_original>
